<compile_context>
chip_gen: v5e
topology: v5e:2x2
jax: 0.10.0
libtpu: 0.0.40
codegen_flags: <defaults>
</compile_context>

<pallas_src>
import jax
import jax.numpy as jnp
from jax.experimental import pallas as pl
from jax.experimental.pallas import tpu as pltpu


# ----------------------------------------------------------------------------
# Kernels
# ----------------------------------------------------------------------------
def mlp_kernel_fused(x_ref, w1_ref, b1_ref, w2_ref, b2_ref, o_ref):
    """Whole hidden dim in one shot; weights resident, no scratch."""
    h = jnp.dot(x_ref[...], w1_ref[...], preferred_element_type=jnp.float32)
    h = jnp.maximum(h + b1_ref[...], 0.0)                    # bias + ReLU in f32
    o = jnp.dot(h.astype(w2_ref.dtype), w2_ref[...],
                preferred_element_type=jnp.float32)
    o_ref[...] = (o + b2_ref[...]).astype(o_ref.dtype)


def mlp_kernel_ktiled(x_ref, w1_ref, b1_ref, w2_ref, b2_ref, o_ref):
    """Hidden dim tiled on the last ('arbitrary') grid axis; accumulate
    directly into the resident f32 output block (no VMEM scratch)."""
    k = pl.program_id(1)

    h = jnp.dot(x_ref[...], w1_ref[...], preferred_element_type=jnp.float32)
    h = jnp.maximum(h + b1_ref[...], 0.0)
    part = jnp.dot(h.astype(w2_ref.dtype), w2_ref[...],
                   preferred_element_type=jnp.float32)

    @pl.when(k == 0)
    def _init():
        o_ref[...] = part + b2_ref[...]

    @pl.when(k > 0)
    def _acc():
        o_ref[...] += part


# ----------------------------------------------------------------------------
# Helpers
# ----------------------------------------------------------------------------
def _round_up(n, m):
    return ((n + m - 1) // m) * m


def _pad_dim(n):
    # 256-align when the natural dim is >= 256 (full-rate on v6e/v7x MXU),
    # otherwise 128-align (lane width; full-rate on v5e).
    return _round_up(n, 256 if n >= 256 else 128)


def _pick_tile(total, target):
    """Largest 128-multiple divisor of `total` that is <= target."""
    if total <= target:
        return total
    for cand in range((target // 128) * 128, 127, -128):
        if total % cand == 0:
            return cand
    return 128


def _tpu_vmem_limit_bytes():
    """Per-generation scoped-VMEM limit to request (None if unrecognized)."""
    try:
        kind = jax.devices()[0].device_kind.lower()
    except Exception:
        return None
    if "v7" in kind or "7x" in kind:
        return 52 * 1024 * 1024          # 64 MiB physical on v7x: leave headroom
    if any(t in kind for t in ("v4", "v5", "v6")):
        return 100 * 1024 * 1024         # 128 MiB physical on v4/v5e/v6e
    return None


def _nbytes(a):
    return int(a.size) * int(a.dtype.itemsize)


# ----------------------------------------------------------------------------
# Parameter preparation (pad / cast ONCE, hoisted out of the forward path)
# ----------------------------------------------------------------------------
def prepare_params(w1, b1, w2, b2, *, use_bf16=True, vmem_limit_bytes=None):
    d_in, n_hunit = w1.shape
    n_h2, d_out = w2.shape
    assert n_h2 == n_hunit and b1.shape == (n_hunit,) and b2.shape == (d_out,)

    cdt = jnp.bfloat16 if use_bf16 else jnp.float32
    bpe = 2 if use_bf16 else 4

    Dp = _pad_dim(d_in)
    Op = _pad_dim(d_out)
    Hp_nat = _pad_dim(n_hunit)

    detected = _tpu_vmem_limit_bytes()
    limit = vmem_limit_bytes if vmem_limit_bytes is not None else detected
    budget = int(0.7 * (limit if limit is not None else 48 * 1024 * 1024))

    # Rough resident working set of the fused path (tb<=256, tn<=2048):
    tb_est, tn_est = 256, min(Op, 2048)
    fused_bytes = (2 * (Dp * Hp_nat + Hp_nat * tn_est) * bpe   # W1, W2 (dbl buf)
                   + 2 * tb_est * Dp * bpe                     # x tile
                   + 2 * (Hp_nat + tn_est) * 4                 # b1, b2
                   + 2 * tb_est * tn_est * 4                   # out tile
                   + tb_est * Hp_nat * (4 + bpe))              # h (f32 + cast)

    if fused_bytes <= budget:
        tk = Hp = Hp_nat
        default_path = "fused"
    else:
        # Fixed target tile; round Hp UP (zero padding is exact), no divisor search.
        tk = min(512, Hp_nat)
        Hp = _round_up(n_hunit, tk)
        default_path = "ktiled"

    w1p = jnp.zeros((Dp, Hp), cdt).at[:d_in, :n_hunit].set(w1.astype(cdt))
    w2p = jnp.zeros((Hp, Op), cdt).at[:n_hunit, :d_out].set(w2.astype(cdt))
    b1p = jnp.zeros((1, Hp), jnp.float32).at[:, :n_hunit].set(
        b1.astype(jnp.float32)[None, :])
    b2p = jnp.zeros((1, Op), jnp.float32).at[:, :d_out].set(
        b2.astype(jnp.float32)[None, :])

    return dict(w1=w1p, b1=b1p, w2=w2p, b2=b2p,
                d_in=d_in, n_hunit=n_hunit, d_out=d_out,
                Dp=Dp, Hp=Hp, Op=Op, tk=tk,
                compute_dtype=cdt, default_path=default_path,
                vmem_limit_bytes=limit)


# ----------------------------------------------------------------------------
# Forward
# ----------------------------------------------------------------------------
def mlp_forward(x, params, *, path=None, tk=None, tn=None):
    """x: (B, d_in) -> (B, d_out) in x.dtype, using pre-padded params."""
    orig_dtype = x.dtype
    B, d_in = x.shape
    assert d_in == params["d_in"]
    Dp, Hp, Op = params["Dp"], params["Hp"], params["Op"]
    d_out = params["d_out"]
    cdt = params["compute_dtype"]
    path = path or params["default_path"]

    # --- batch tile: lane-dense, >=2 parallel steps when B > 128 (v7x megacore)
    SUB = 16
    B16 = _round_up(B, SUB)
    if B16 <= 128:
        tb = B16
    elif B16 <= 512:
        tb = _round_up(B16 // 2, SUB)
    else:
        tb = 256
    Bp = _round_up(B, tb)
    nb = Bp // tb

    # --- pad / cast x only (weights were padded once in prepare_params)
    if (Bp, Dp) == (B, d_in) and x.dtype == cdt:
        xp = x
    else:
        xp = jnp.zeros((Bp, Dp), cdt).at[:B, :d_in].set(x.astype(cdt))

    cp_kwargs = {}
    if params["vmem_limit_bytes"] is not None:
        cp_kwargs["vmem_limit_bytes"] = int(params["vmem_limit_bytes"])

    w1p, b1p, w2p, b2p = params["w1"], params["b1"], params["w2"], params["b2"]
    flops = 2 * Bp * Dp * Hp + 2 * Bp * Hp * Op

    if path == "fused":
        # Weights resident across the whole grid (constant index_maps).
        if tn is None:
            tn = _pick_tile(Op, 2048)
        assert Op % tn == 0
        nn = Op // tn
        out_dtype = jnp.bfloat16 if orig_dtype == jnp.bfloat16 else jnp.float32

        bytes_accessed = (_nbytes(xp) + _nbytes(w1p) + _nbytes(b1p)
                          + _nbytes(w2p) + _nbytes(b2p)
                          + Bp * Op * (2 if out_dtype == jnp.bfloat16 else 4))

        out = pl.pallas_call(
            mlp_kernel_fused,
            out_shape=jax.ShapeDtypeStruct((Bp, Op), out_dtype),
            grid_spec=pltpu.PrefetchScalarGridSpec(
                num_scalar_prefetch=0,
                grid=(nb, nn),
                in_specs=[
                    pl.BlockSpec((tb, Dp), lambda i, j: (i, 0)),   # x (batch tile)
                    pl.BlockSpec((Dp, Hp), lambda i, j: (0, 0)),   # W1 (resident)
                    pl.BlockSpec((1, Hp), lambda i, j: (0, 0)),    # b1 (resident)
                    pl.BlockSpec((Hp, tn), lambda i, j: (0, j)),   # W2 (out tile)
                    pl.BlockSpec((1, tn), lambda i, j: (0, j)),    # b2 (out tile)
                ],
                out_specs=pl.BlockSpec((tb, tn), lambda i, j: (i, j)),
            ),
            compiler_params=pltpu.CompilerParams(
                dimension_semantics=("parallel", "parallel"), **cp_kwargs),
            cost_estimate=pl.CostEstimate(
                flops=int(flops), transcendentals=0,
                bytes_accessed=int(bytes_accessed)),
        )(xp, w1p, b1p, w2p, b2p)

    elif path == "ktiled":
        # Hidden-dim reduction tiling; accumulate directly into f32 output block.
        # TODO(synk): combine k-tiling with an output (N) tile for the rare case
        # of both huge n_hunit and huge d_out.
        tk = tk if tk is not None else params["tk"]
        assert Hp % tk == 0
        nk = Hp // tk

        bytes_accessed = (_nbytes(xp)
                          + nb * (_nbytes(w1p) + _nbytes(b1p) + _nbytes(w2p))
                          + _nbytes(b2p) + Bp * Op * 4)

        out = pl.pallas_call(
            mlp_kernel_ktiled,
            out_shape=jax.ShapeDtypeStruct((Bp, Op), jnp.float32),
            grid_spec=pltpu.PrefetchScalarGridSpec(
                num_scalar_prefetch=0,
                grid=(nb, nk),
                in_specs=[
                    pl.BlockSpec((tb, Dp), lambda i, k: (i, 0)),   # x (batch tile)
                    pl.BlockSpec((Dp, tk), lambda i, k: (0, k)),   # W1 hidden tile
                    pl.BlockSpec((1, tk), lambda i, k: (0, k)),    # b1 hidden tile
                    pl.BlockSpec((tk, Op), lambda i, k: (k, 0)),   # W2 hidden tile
                    pl.BlockSpec((1, Op), lambda i, k: (0, 0)),    # b2 (resident)
                ],
                out_specs=pl.BlockSpec((tb, Op), lambda i, k: (i, 0)),
            ),
            compiler_params=pltpu.CompilerParams(
                dimension_semantics=("parallel", "arbitrary"), **cp_kwargs),
            cost_estimate=pl.CostEstimate(
                flops=int(flops), transcendentals=0,
                bytes_accessed=int(bytes_accessed)),
        )(xp, w1p, b1p, w2p, b2p)

    else:
        raise ValueError(f"unknown path: {path}")

    if (Bp, Op) == (B, d_out) and out.dtype == orig_dtype:
        return out
    return out[:B, :d_out].astype(orig_dtype)


# ----------------------------------------------------------------------------
# Parameter init matching torch.nn.Linear defaults (n_hlayer == 1 branch)
# ----------------------------------------------------------------------------
def init_params(key, d_in, d_out, n_hlayer, n_hunit, dtype=jnp.float32):
    assert n_hlayer == 1, "this script implements the 1-hidden-layer branch"
    k1, k2, k3, k4 = jax.random.split(key, 4)
    lim1 = 1.0 / jnp.sqrt(d_in)
    lim2 = 1.0 / jnp.sqrt(n_hunit)
    w1 = jax.random.uniform(k1, (d_in, n_hunit), dtype, -lim1, lim1)
    b1 = jax.random.uniform(k2, (n_hunit,), dtype, -lim1, lim1)
    w2 = jax.random.uniform(k3, (n_hunit, d_out), dtype, -lim2, lim2)
    b2 = jax.random.uniform(k4, (d_out,), dtype, -lim2, lim2)
    return w1, b1, w2, b2


if __name__ == "__main__":
    # ---- Test 1: small MLP, bf16-on-MXU fused path (weights padded once) ----
    batch, d_in, n_hunit, d_out = 8, 32, 64, 16
    key = jax.random.PRNGKey(0)
    kx, kp = jax.random.split(key)
    x = jax.random.normal(kx, (batch, d_in), jnp.float32)
    w1, b1, w2, b2 = init_params(kp, d_in, d_out, n_hlayer=1, n_hunit=n_hunit)

    ref = jnp.maximum(x @ w1 + b1[None, :], 0.0) @ w2 + b2[None, :]

    params_bf16 = prepare_params(w1, b1, w2, b2, use_bf16=True)
    out_bf16 = mlp_forward(x, params_bf16)
    jax.block_until_ready(out_bf16)
    assert out_bf16.shape == (batch, d_out)
    assert out_bf16.dtype == x.dtype
    assert jnp.allclose(out_bf16, ref, atol=5e-2, rtol=5e-2)

    # ---- Test 2: full-f32 fused path (tight numerical check of structure) ----
    params_f32 = prepare_params(w1, b1, w2, b2, use_bf16=False)
    out_f32 = mlp_forward(x, params_f32)
    jax.block_until_ready(out_f32)
    assert jnp.allclose(out_f32, ref, atol=1e-5, rtol=1e-5)

    # ---- Test 3: exercise the k-tiled (hidden-reduction) kernel path --------
    b2_, di2, nh2, do2 = 40, 96, 600, 48
    k2x, k2p = jax.random.split(jax.random.PRNGKey(1))
    x2 = jax.random.normal(k2x, (b2_, di2), jnp.float32)
    w1b, b1b, w2b, b2b = init_params(k2p, di2, do2, n_hlayer=1, n_hunit=nh2)
    ref2 = jnp.maximum(x2 @ w1b + b1b[None, :], 0.0) @ w2b + b2b[None, :]

    p2 = prepare_params(w1b, b1b, w2b, b2b, use_bf16=False)
    out2 = mlp_forward(x2, p2, path="ktiled", tk=128)   # multiple k steps
    jax.block_until_ready(out2)
    assert out2.shape == (b2_, do2)
    assert jnp.allclose(out2, ref2, atol=1e-4, rtol=1e-4)

    print("KERNEL_OK")
</pallas_src>

<mosaic_0001>
module attributes {stable_mosaic.version = 11 : i64} {
  func.func @mlp_kernel_fused(%arg0: i32, %arg1: i32, %arg2: memref<16x128xbf16, #tpu.memory_space<vmem>>, %arg3: memref<128x128xbf16, #tpu.memory_space<vmem>>, %arg4: memref<1x128xf32, #tpu.memory_space<vmem>>, %arg5: memref<128x128xbf16, #tpu.memory_space<vmem>>, %arg6: memref<1x128xf32, #tpu.memory_space<vmem>>, %arg7: memref<16x128xf32, #tpu.memory_space<vmem>>) attributes {dimension_semantics = [#tpu.dimension_semantics<parallel>, #tpu.dimension_semantics<parallel>], iteration_bounds = array<i64: 1, 1>, scalar_prefetch = 0 : i64, scratch_operands = 0 : i64, tpu.core_type = #tpu.core_type<tc>, window_params = [{transform_indices = @transform_0, window_bounds = array<i64: 16, 128>}, {pipeline_mode = #tpu.pipeline_mode<synchronous>, transform_indices = @transform_1, window_bounds = array<i64: 128, 128>}, {pipeline_mode = #tpu.pipeline_mode<synchronous>, transform_indices = @transform_2, window_bounds = array<i64: 1, 128>}, {transform_indices = @transform_3, window_bounds = array<i64: 128, 128>}, {transform_indices = @transform_4, window_bounds = array<i64: 1, 128>}, {transform_indices = @transform_5, window_bounds = array<i64: 16, 128>}]} {
    %c0 = arith.constant 0 : index
    %c0_0 = arith.constant 0 : index
    %0 = vector.load %arg2[%c0, %c0_0] : memref<16x128xbf16, #tpu.memory_space<vmem>>, vector<16x128xbf16>
    %c0_1 = arith.constant 0 : index
    %c0_2 = arith.constant 0 : index
    %1 = vector.load %arg3[%c0_1, %c0_2] : memref<128x128xbf16, #tpu.memory_space<vmem>>, vector<128x128xbf16>
    %cst = arith.constant dense<0.000000e+00> : vector<16x128xf32>
    %2 = tpu.matmul %0, %1, %cst {dimension_numbers = #tpu.dot_dimension_numbers<[1], [0], [0], [1], [0, 0, 1, 1], [], []>} : vector<16x128xbf16>, vector<128x128xbf16>, vector<16x128xf32> -> vector<16x128xf32>
    %c0_3 = arith.constant 0 : index
    %c0_4 = arith.constant 0 : index
    %3 = vector.load %arg4[%c0_3, %c0_4] : memref<1x128xf32, #tpu.memory_space<vmem>>, vector<1x128xf32>
    %4 = vector.broadcast %3 : vector<1x128xf32> to vector<16x128xf32>
    %5 = arith.addf %2, %4 : vector<16x128xf32>
    %cst_5 = arith.constant 0.000000e+00 : f32
    %6 = vector.broadcast %cst_5 : f32 to vector<16x128xf32>
    %7 = arith.maximumf %5, %6 : vector<16x128xf32>
    %8 = arith.truncf %7 : vector<16x128xf32> to vector<16x128xbf16>
    %c0_6 = arith.constant 0 : index
    %c0_7 = arith.constant 0 : index
    %9 = vector.load %arg5[%c0_6, %c0_7] : memref<128x128xbf16, #tpu.memory_space<vmem>>, vector<128x128xbf16>
    %cst_8 = arith.constant dense<0.000000e+00> : vector<16x128xf32>
    %10 = tpu.matmul %8, %9, %cst_8 {dimension_numbers = #tpu.dot_dimension_numbers<[1], [0], [0], [1], [0, 0, 1, 1], [], []>} : vector<16x128xbf16>, vector<128x128xbf16>, vector<16x128xf32> -> vector<16x128xf32>
    %c0_9 = arith.constant 0 : index
    %c0_10 = arith.constant 0 : index
    %11 = vector.load %arg6[%c0_9, %c0_10] : memref<1x128xf32, #tpu.memory_space<vmem>>, vector<1x128xf32>
    %12 = vector.broadcast %11 : vector<1x128xf32> to vector<16x128xf32>
    %13 = arith.addf %10, %12 : vector<16x128xf32>
    %c0_11 = arith.constant 0 : index
    %c0_12 = arith.constant 0 : index
    %14 = vector.load %arg7[%c0_11, %c0_12] : memref<16x128xf32, #tpu.memory_space<vmem>>, vector<16x128xf32>
    tpu.vector_store %arg7[%c0_11, %c0_12], %13 {strides = array<i32>} : memref<16x128xf32, #tpu.memory_space<vmem>>, vector<16x128xf32>,
    return
  }
  func.func @transform_0(%arg0: i32, %arg1: i32) -> (i32, i32) {
    %c0_i32 = arith.constant 0 : i32
    %c0_i32_0 = arith.constant 0 : i32
    return %arg0, %c0_i32 : i32, i32
  }
  func.func @transform_1(%arg0: i32, %arg1: i32) -> (i32, i32) {
    %c0_i32 = arith.constant 0 : i32
    %c0_i32_0 = arith.constant 0 : i32
    %c0_i32_1 = arith.constant 0 : i32
    return %c0_i32, %c0_i32_0 : i32, i32
  }
  func.func @transform_2(%arg0: i32, %arg1: i32) -> (i32, i32) {
    %c0_i32 = arith.constant 0 : i32
    %c0_i32_0 = arith.constant 0 : i32
    %c0_i32_1 = arith.constant 0 : i32
    return %c0_i32, %c0_i32_0 : i32, i32
  }
  func.func @transform_3(%arg0: i32, %arg1: i32) -> (i32, i32) {
    %c0_i32 = arith.constant 0 : i32
    %c0_i32_0 = arith.constant 0 : i32
    return %c0_i32, %arg1 : i32, i32
  }
  func.func @transform_4(%arg0: i32, %arg1: i32) -> (i32, i32) {
    %c0_i32 = arith.constant 0 : i32
    %c0_i32_0 = arith.constant 0 : i32
    return %c0_i32, %arg1 : i32, i32
  }
  func.func @transform_5(%arg0: i32, %arg1: i32) -> (i32, i32) {
    %c0_i32 = arith.constant 0 : i32
    return %arg0, %arg1 : i32, i32
  }
}

</mosaic_0001>

<llo_original>
// kernel: tpu_custom_call.1
$region0: #{tpu_custom_call.1}
  #allocation0 [shape = 'u32[]', space=smem, size = 0x4, offset = 0x4, fixed_abs, tag = 'smem constant byte address 0x4 - core index']
  #allocation1 [shape = 'u32[72,128]{1,0:T(1,128)}', space=vmem, size = 0x9000, scoped, tag = 'internal scratch']
  %s0 = inlined_call_operand.hbm [shape: bf16[16,128], index: 0, kind: input, shape index: {}]
  %s1 = inlined_call_operand.hbm [shape: bf16[128,128], index: 1, kind: input, shape index: {}]
  %s2 = inlined_call_operand.vmem [shape: f32[1,128], index: 2, kind: input, shape index: {}]
  %s3 = inlined_call_operand.hbm [shape: bf16[128,128], index: 3, kind: input, shape index: {}]
  %s4 = inlined_call_operand.vmem [shape: f32[1,128], index: 4, kind: input, shape index: {}]
  %s5 = inlined_call_operand.hbm [shape: f32[16,128], index: 5, kind: output, shape index: {}]
  %s6 = sld [smem:[#allocation0]]
  $region42: #{tpu_custom_call.1} parent=0
    _
  %s8 = ssub.s32 1, %s6
  %s9 = scalar_select 0, %s8, %s6
  $region1: #{tpu_custom_call.1} parent=0
    #allocation2 [shape = 'u8[4096]{0}', space=vmem, size = 0x1000, scoped, tag = 'input window, operand 0, single buffered']
    #allocation3 [shape = 's32[1]{0}', space=sflag, size = 0x4, scoped, tag = 'scoped memory for tpu_custom_call.1']
    #allocation4 [shape = 's32[1]{0}', space=sflag, size = 0x4, scoped, tag = 'scoped memory for tpu_custom_call.1']
    #allocation5 [shape = 'u8[32768]{0}', space=vmem, size = 0x8000, scoped, tag = 'input window, operand 1, single buffered']
    #allocation6 [shape = 's32[1]{0}', space=sflag, size = 0x4, scoped, tag = 'scoped memory for tpu_custom_call.1']
    #allocation7 [shape = 'u8[32768]{0}', space=vmem, size = 0x8000, scoped, tag = 'input window, operand 3, single buffered']
    #allocation8 [shape = 'u8[8192]{0}', space=vmem, size = 0x2000, scoped, tag = 'output window, operand 0, single buffered']
    %10 = vsyncpa [#allocation3], 0
    %11 = vsyncpa [#allocation6], 0
    %12 = vsyncpa [#allocation4], 0
    // Predicated region
    $region2: #{tpu_custom_call.1} parent=1 // pred_check
      _
    $region3: #{tpu_custom_call.1} parent=1 // pred_check_branch
      %14 = sbr.rel (0) target = $region5
    $region4: #{tpu_custom_call.1} parent=1 // pred_region
      %16 = vsyncadd [#allocation3], 0
      %s17 = sshll.u32 %s0, 4
      %s18 = int_to_ptr.hbm [resolvable:$true] %s17
      %s19 = sshll.u32 [#allocation2], 4
      %s20 = int_to_ptr.vmem [resolvable:$true] %s19
      %25 = dma.hbm_to_vmem [thread:$0]  %s18, 128, %s20, [#allocation3], 64, 64, 4
    $region5: #{tpu_custom_call.1} parent=1 // pred_fallthru
      _
    // Predicated region
    $region6: #{tpu_custom_call.1} parent=1 // pred_check
      _
    $region7: #{tpu_custom_call.1} parent=1 // pred_check_branch
      %27 = sbr.rel (0) target = $region9
    $region8: #{tpu_custom_call.1} parent=1 // pred_region
      %29 = vsyncadd [#allocation6], 0
      %s30 = sshll.u32 %s1, 4
      %s31 = int_to_ptr.hbm [resolvable:$true] %s30
      %s32 = sshll.u32 [#allocation5], 4
      %s33 = int_to_ptr.vmem [resolvable:$true] %s32
      %38 = dma.hbm_to_vmem [thread:$0]  %s31, 1024, %s33, [#allocation6], 64, 64, 4
    $region9: #{tpu_custom_call.1} parent=1 // pred_fallthru
      _
    // Predicated region
    $region10: #{tpu_custom_call.1} parent=1 // pred_check
      _
    $region11: #{tpu_custom_call.1} parent=1 // pred_check_branch
      %40 = sbr.rel (0) target = $region13
    $region12: #{tpu_custom_call.1} parent=1 // pred_region
      _
    $region13: #{tpu_custom_call.1} parent=1 // pred_fallthru
      _
    // Predicated region
    $region14: #{tpu_custom_call.1} parent=1 // pred_check
      _
    $region15: #{tpu_custom_call.1} parent=1 // pred_check_branch
      %42 = sbr.rel (0) target = $region17
    $region16: #{tpu_custom_call.1} parent=1 // pred_region
      %44 = vsyncadd [#allocation6], 0
      %s45 = sshll.u32 %s3, 4
      %s46 = int_to_ptr.hbm [resolvable:$true] %s45
      %s47 = sshll.u32 [#allocation7], 4
      %s48 = int_to_ptr.vmem [resolvable:$true] %s47
      %53 = dma.hbm_to_vmem [thread:$0]  %s46, 1024, %s48, [#allocation6], 64, 64, 4
    $region17: #{tpu_custom_call.1} parent=1 // pred_fallthru
      _
    // Predicated region
    $region18: #{tpu_custom_call.1} parent=1 // pred_check
      _
    $region19: #{tpu_custom_call.1} parent=1 // pred_check_branch
      %55 = sbr.rel (0) target = $region21
    $region20: #{tpu_custom_call.1} parent=1 // pred_region
      _
    $region21: #{tpu_custom_call.1} parent=1 // pred_fallthru
      _
    // Predicated region
    $region22: #{tpu_custom_call.1} parent=1 // pred_check
      _
    $region23: #{tpu_custom_call.1} parent=1 // pred_check_branch
      %57 = sbr.rel (0) target = $region25
    $region24: #{tpu_custom_call.1} parent=1 // pred_region
      %59 = dma.done [#allocation3], 128
    $region25: #{tpu_custom_call.1} parent=1 // pred_fallthru
      _
    // Predicated region
    $region26: #{tpu_custom_call.1} parent=1 // pred_check
      _
    $region27: #{tpu_custom_call.1} parent=1 // pred_check_branch
      %61 = sbr.rel (0) target = $region29
    $region28: #{tpu_custom_call.1} parent=1 // pred_region
      %63 = dma.done [#allocation6], 1024
    $region29: #{tpu_custom_call.1} parent=1 // pred_fallthru
      _
    // Predicated region
    $region30: #{tpu_custom_call.1} parent=1 // pred_check
      _
    $region31: #{tpu_custom_call.1} parent=1 // pred_check_branch
      %65 = sbr.rel (0) target = $region33
    $region32: #{tpu_custom_call.1} parent=1 // pred_region
      %67 = dma.done [#allocation6], 1024
    $region33: #{tpu_custom_call.1} parent=1 // pred_fallthru
      _
    %v68 = vld [vmem:[#allocation2] sm:$0xf]
    %v69 = vld [vmem:[#allocation2 + $0x4] sm:$0xf]
    %v70 = vld [vmem:[#allocation5] sm:$0xf]
    %v71 = vld [vmem:[#allocation5 + $0x4] sm:$0xf]
    %v72 = vld [vmem:[#allocation5 + $0x8] sm:$0xf]
    %v73 = vld [vmem:[#allocation5 + $0xc] sm:$0xf]
    %v74 = vld [vmem:[#allocation5 + $0x10] sm:$0xf]
    %v75 = vld [vmem:[#allocation5 + $0x14] sm:$0xf]
    %v76 = vld [vmem:[#allocation5 + $0x18] sm:$0xf]
    %v77 = vld [vmem:[#allocation5 + $0x1c] sm:$0xf]
    %v78 = vld [vmem:[#allocation5 + $0x20] sm:$0xf]
    %v79 = vld [vmem:[#allocation5 + $0x24] sm:$0xf]
    %v80 = vld [vmem:[#allocation5 + $0x28] sm:$0xf]
    %v81 = vld [vmem:[#allocation5 + $0x2c] sm:$0xf]
    %v82 = vld [vmem:[#allocation5 + $0x30] sm:$0xf]
    %v83 = vld [vmem:[#allocation5 + $0x34] sm:$0xf]
    %v84 = vld [vmem:[#allocation5 + $0x38] sm:$0xf]
    %v85 = vld [vmem:[#allocation5 + $0x3c] sm:$0xf]
    %v86 = vld [vmem:[%s2] sm:$0x1]
    %v88 = vperm.slane %v86, 0
    %v92 = vunpack.c.l.b16 %v68
    %v93 = vunpack.c.l.b16 %v69
    %v94 = vpack.c.b16 %v93, %v92
    %v112 = vunpack.c.l.b16 %v70
    %v113 = vunpack.c.l.b16 %v71
    %v114 = vunpack.c.l.b16 %v72
    %v115 = vunpack.c.l.b16 %v73
    %v116 = vunpack.c.l.b16 %v74
    %v117 = vunpack.c.l.b16 %v75
    %v118 = vunpack.c.l.b16 %v76
    %v119 = vunpack.c.l.b16 %v77
    %v120 = vunpack.c.l.b16 %v78
    %v121 = vunpack.c.l.b16 %v79
    %v122 = vunpack.c.l.b16 %v80
    %v123 = vunpack.c.l.b16 %v81
    %v124 = vunpack.c.l.b16 %v82
    %v125 = vunpack.c.l.b16 %v83
    %v126 = vunpack.c.l.b16 %v84
    %v127 = vunpack.c.l.b16 %v85
    %v128 = vpack.c.b16 %v113, %v112
    %v129 = vpack.c.b16 %v115, %v114
    %v130 = vpack.c.b16 %v117, %v116
    %v131 = vpack.c.b16 %v119, %v118
    %v132 = vpack.c.b16 %v121, %v120
    %v133 = vpack.c.b16 %v123, %v122
    %v134 = vpack.c.b16 %v125, %v124
    %v135 = vpack.c.b16 %v127, %v126
    %144 = vmatpush.bf16.msra.mxu0 %v135
    %145 = vmatpush.bf16.msra.mxu0 %v134
    %146 = vmatpush.bf16.msra.mxu0 %v133
    %147 = vmatpush.bf16.msra.mxu0 %v132
    %148 = vmatpush.bf16.msra.mxu0 %v131
    %149 = vmatpush.bf16.msra.mxu0 %v130
    %150 = vmatpush.bf16.msra.mxu0 %v129
    %151 = vmatpush.bf16.msra.mxu0 %v128
    %152 = vmatmul.bf16.gmra.mxu0 %v94
    %v153 = vpop.f32.mrf.mxu0
    %v154 = vadd.f32 %v88, %v153
    %v155 = vpop.f32.mrf.mxu0
    %v156 = vadd.f32 %v88, %v155
    %157 = vdwg.mxu0
    %v158 = vmax.f32 %v154, 0.0
    %v159 = vmax.f32 %v156, 0.0
    %v160 = vpack.c.bf16 %v159, %v158
    %v161 = vld [vmem:[#allocation7] sm:$0xf]
    %v162 = vld [vmem:[#allocation7 + $0x4] sm:$0xf]
    %v163 = vld [vmem:[#allocation7 + $0x8] sm:$0xf]
    %v164 = vld [vmem:[#allocation7 + $0xc] sm:$0xf]
    %v165 = vld [vmem:[#allocation7 + $0x10] sm:$0xf]
    %v166 = vld [vmem:[#allocation7 + $0x14] sm:$0xf]
    %v167 = vld [vmem:[#allocation7 + $0x18] sm:$0xf]
    %v168 = vld [vmem:[#allocation7 + $0x1c] sm:$0xf]
    %v169 = vld [vmem:[#allocation7 + $0x20] sm:$0xf]
    %v170 = vld [vmem:[#allocation7 + $0x24] sm:$0xf]
    %v171 = vld [vmem:[#allocation7 + $0x28] sm:$0xf]
    %v172 = vld [vmem:[#allocation7 + $0x2c] sm:$0xf]
    %v173 = vld [vmem:[#allocation7 + $0x30] sm:$0xf]
    %v174 = vld [vmem:[#allocation7 + $0x34] sm:$0xf]
    %v175 = vld [vmem:[#allocation7 + $0x38] sm:$0xf]
    %v176 = vld [vmem:[#allocation7 + $0x3c] sm:$0xf]
    %v177 = vld [vmem:[%s4] sm:$0x1]
    %v179 = vperm.slane %v177, 0
    %v197 = vunpack.c.l.b16 %v161
    %v198 = vunpack.c.l.b16 %v162
    %v199 = vunpack.c.l.b16 %v163
    %v200 = vunpack.c.l.b16 %v164
    %v201 = vunpack.c.l.b16 %v165
    %v202 = vunpack.c.l.b16 %v166
    %v203 = vunpack.c.l.b16 %v167
    %v204 = vunpack.c.l.b16 %v168
    %v205 = vunpack.c.l.b16 %v169
    %v206 = vunpack.c.l.b16 %v170
    %v207 = vunpack.c.l.b16 %v171
    %v208 = vunpack.c.l.b16 %v172
    %v209 = vunpack.c.l.b16 %v173
    %v210 = vunpack.c.l.b16 %v174
    %v211 = vunpack.c.l.b16 %v175
    %v212 = vunpack.c.l.b16 %v176
    %v213 = vpack.c.b16 %v198, %v197
    %v214 = vpack.c.b16 %v200, %v199
    %v215 = vpack.c.b16 %v202, %v201
    %v216 = vpack.c.b16 %v204, %v203
    %v217 = vpack.c.b16 %v206, %v205
    %v218 = vpack.c.b16 %v208, %v207
    %v219 = vpack.c.b16 %v210, %v209
    %v220 = vpack.c.b16 %v212, %v211
    %229 = vmatpush.bf16.msra.mxu0 %v220
    %230 = vmatpush.bf16.msra.mxu0 %v219
    %231 = vmatpush.bf16.msra.mxu0 %v218
    %232 = vmatpush.bf16.msra.mxu0 %v217
    %233 = vmatpush.bf16.msra.mxu0 %v216
    %234 = vmatpush.bf16.msra.mxu0 %v215
    %235 = vmatpush.bf16.msra.mxu0 %v214
    %236 = vmatpush.bf16.msra.mxu0 %v213
    %237 = vmatmul.bf16.gmra.mxu0 %v160
    %v238 = vpop.f32.mrf.mxu0
    %v239 = vadd.f32 %v179, %v238
    %v240 = vpop.f32.mrf.mxu0
    %v241 = vadd.f32 %v179, %v240
    %242 = vdwg.mxu0
    %243 = vst [vmem:[#allocation8] sm:$0xff] %v239
    %244 = vst [vmem:[#allocation8 + $0x8] sm:$0xff] %v241
    // Predicated region
    $region34: #{tpu_custom_call.1} parent=1 // pred_check
      _
    $region35: #{tpu_custom_call.1} parent=1 // pred_check_branch
      %246 = sbr.rel (0) target = $region37
    $region36: #{tpu_custom_call.1} parent=1 // pred_region
      %248 = vsyncadd [#allocation4], 0
      %s249 = sshll.u32 [#allocation8], 4
      %s250 = int_to_ptr.vmem [resolvable:$true] %s249
      %s251 = sshll.u32 %s5, 4
      %s252 = int_to_ptr.hbm [resolvable:$true] %s251
      %257 = dma.vmem_to_hbm [thread:$0]  %s250, 256, %s252, [#allocation4], 128, 128, 8
    $region37: #{tpu_custom_call.1} parent=1 // pred_fallthru
      _
    // Predicated region
    $region38: #{tpu_custom_call.1} parent=1 // pred_check
      _
    $region39: #{tpu_custom_call.1} parent=1 // pred_check_branch
      %259 = sbr.rel (0) target = $region41
    $region40: #{tpu_custom_call.1} parent=1 // pred_region
      %261 = dma.done [#allocation4], 256
    $region41: #{tpu_custom_call.1} parent=1 // pred_fallthru
      _
    %262 = vsyncpa [#allocation3], 1
    %263 = vsyncpa [#allocation6], 1
    %264 = vsyncpa [#allocation4], 1

</llo_original>
